<compile_context>
chip_gen: v7x
topology: tpu7x:2x2x1
jax: 0.10.0
libtpu: 0.0.40
codegen_flags: <defaults>
</compile_context>

<pallas_src>
import functools
import math

import jax
import jax.numpy as jnp
from jax.experimental import pallas as pl
from jax.experimental.pallas import tpu as pltpu


def _masked_linear_kernel(x_ref, w_ref, b_ref, o_ref, acc_ref):
    k = pl.program_id(2)

    # bf16 x bf16 -> f32 on the MXU, canonical (tm,tk) x (tk,tn) tiles.
    prod = jnp.dot(x_ref[...], w_ref[...], preferred_element_type=jnp.float32)

    @pl.when(k == 0)
    def _():
        # First K step writes directly (saves a zero-init store + reload).
        acc_ref[...] = prod

    @pl.when(k != 0)
    def _():
        acc_ref[...] += prod

    @pl.when(k == pl.num_programs(2) - 1)
    def _():
        # Bias added exactly once per output tile, at the finalize step.
        o_ref[...] = (acc_ref[...] + b_ref[...]).astype(o_ref.dtype)


def _cdiv(a: int, b: int) -> int:
    return (a + b - 1) // b


def _round_up(a: int, b: int) -> int:
    return _cdiv(a, b) * b


def _tile(dim: int, cap: int, align: int) -> int:
    """Balanced tile: multiple of `align`, <= cap, minimal padding waste."""
    d = _round_up(dim, align)
    if d <= cap:
        return d
    n_blocks = _cdiv(d, cap)
    return _round_up(_cdiv(d, n_blocks), align)


@functools.partial(
    jax.jit, static_argnames=("compute_dtype", "tm_max", "tn_max", "tk_max")
)
def masked_linear(
    x,
    weight,
    mask,
    bias=None,
    *,
    compute_dtype=jnp.bfloat16,
    tm_max=512,
    tn_max=512,
    tk_max=1024,
):
    """y = x @ (weight * mask)^T + bias.

    x: (..., in_features); weight/mask: (out, in); bias: (out,) or None.
    Leading dims of x are flattened to M and restored at the end.
    """
    out_features, in_features = weight.shape
    lead_shape = x.shape[:-1]
    x2d = x.reshape(-1, in_features)
    M = x2d.shape[0]
    N = out_features
    K = in_features

    # Tile selection: lane-dense (128-multiples) on N/K, sublane-aligned (8)
    # on M; balanced splitting so the last block is not mostly padding.
    tm = _tile(M, tm_max, 8)
    tn = _tile(N, tn_max, 128)
    tk = _tile(K, tk_max, 128)

    grid_m = _cdiv(M, tm)
    grid_n = _cdiv(N, tn)

    # v7x megacore friendliness: make sure there are >= 2 parallel (M, N)
    # tiles so both TensorCores get work.
    if grid_m * grid_n < 2 and M > 8:
        tm = _round_up(_cdiv(M, 2), 8)
        grid_m = _cdiv(M, tm)

    grid_k = _cdiv(K, tk)
    K_pad = grid_k * tk

    # Pre-mask + cast + transpose the weight once (one fused XLA pass over W),
    # so the kernel streams a single bf16 (K, N) operand and the MXU sees
    # canonical (tm,tk) x (tk,tn) tiles with lane-dense N output.
    # TODO(synk): for inference-style repeated calls with a fixed weight/mask,
    #             hoist this prep (and the K zero-pad) out of the hot path.
    w_masked_t = (weight * mask.astype(weight.dtype)).T.astype(compute_dtype)  # (K, N)
    x_c = x2d.astype(compute_dtype)

    # Only K must be zero-padded (garbage in a K tail would corrupt the
    # accumulation); M/N tails are handled by Pallas' OOB write masking.
    if K_pad != K:
        x_c = jnp.pad(x_c, ((0, 0), (0, K_pad - K)))
        w_masked_t = jnp.pad(w_masked_t, ((0, K_pad - K), (0, 0)))

    if bias is None:
        bias = jnp.zeros((N,), jnp.float32)
    b2d = bias.reshape(1, N).astype(jnp.float32)

    # Advisory cost estimate reflecting re-streaming: W/M read grid_m times,
    # x read grid_n times, output written once.
    bytes_accessed = (
        grid_n * M * K_pad * x_c.dtype.itemsize
        + grid_m * K_pad * N * w_masked_t.dtype.itemsize
        + grid_m * N * b2d.dtype.itemsize
        + M * N * x.dtype.itemsize
    )

    out2d = pl.pallas_call(
        _masked_linear_kernel,
        out_shape=jax.ShapeDtypeStruct((M, N), x.dtype),
        grid_spec=pltpu.PrefetchScalarGridSpec(
            num_scalar_prefetch=0,
            grid=(grid_m, grid_n, grid_k),
            in_specs=[
                pl.BlockSpec((tm, tk), lambda i, j, k: (i, k)),  # x (bf16)
                pl.BlockSpec((tk, tn), lambda i, j, k: (k, j)),  # (W*M)^T (bf16)
                pl.BlockSpec((1, tn), lambda i, j, k: (0, j)),   # bias (f32)
            ],
            out_specs=pl.BlockSpec((tm, tn), lambda i, j, k: (i, j)),
            scratch_shapes=[pltpu.VMEM((tm, tn), jnp.float32)],
        ),
        compiler_params=pltpu.CompilerParams(
            dimension_semantics=("parallel", "parallel", "arbitrary"),
            vmem_limit_bytes=48 * 1024 * 1024,  # safe on v5e/v6e/v7x
        ),
        cost_estimate=pl.CostEstimate(
            flops=2 * M * N * K_pad,
            transcendentals=0,
            bytes_accessed=int(bytes_accessed),
        ),
    )(x_c, w_masked_t, b2d)

    return out2d.reshape(*lead_shape, out_features)


if __name__ == "__main__":
    key = jax.random.PRNGKey(0)

    def run_case(batch, seq, in_features, out_features, key, use_bias=True,
                 **tile_kwargs):
        k_x, k_w, k_b = jax.random.split(key, 3)
        # reset_parameters(): U(-stdv, stdv), stdv = 1/sqrt(in_features)
        stdv = 1.0 / math.sqrt(in_features)
        weight = jax.random.uniform(
            k_w, (out_features, in_features), jnp.float32, minval=-stdv, maxval=stdv
        )
        bias = (
            jax.random.uniform(
                k_b, (out_features,), jnp.float32, minval=-stdv, maxval=stdv
            )
            if use_bias
            else None
        )
        # Mask starts as all-ones; emulate prune(threshold) for coverage.
        mask = jnp.ones((out_features, in_features), jnp.float32)
        mask = jnp.where(jnp.abs(weight) < 0.5 * stdv, 0.0, mask)

        x = jax.random.normal(k_x, (batch, seq, in_features), jnp.float32)

        out = masked_linear(x, weight, mask, bias, **tile_kwargs)
        out = jax.block_until_ready(out)
        assert out.shape == (batch, seq, out_features), out.shape

        wm = weight * mask

        # Tight check against a reference with bf16-rounded operands and f32
        # accumulation (matches the kernel's MXU numerics; differences are
        # summation order only).
        ref_bf16 = jnp.dot(
            x.reshape(-1, in_features).astype(jnp.bfloat16).astype(jnp.float32),
            wm.astype(jnp.bfloat16).astype(jnp.float32).T,
            precision=jax.lax.Precision.HIGHEST,
        ).reshape(batch, seq, out_features)
        if bias is not None:
            ref_bf16 = ref_bf16 + bias
        assert jnp.allclose(out, ref_bf16, atol=1e-3, rtol=1e-3), float(
            jnp.max(jnp.abs(out - ref_bf16))
        )

        # Loose sanity check against the full-f32 torch-equivalent reference
        # (bf16 operand rounding changes numerics vs. f32).
        ref_f32 = x @ wm.T
        if bias is not None:
            ref_f32 = ref_f32 + bias
        assert jnp.allclose(out, ref_f32, atol=5e-2, rtol=5e-2), float(
            jnp.max(jnp.abs(out - ref_f32))
        )

    keys = jax.random.split(key, 4)
    # Small shape from the module spec; N < 128 exercises a partial lane tile.
    run_case(batch=2, seq=8, in_features=32, out_features=64, key=keys[0])
    # Multi-tile grid on all three axes (tile caps lowered to force it),
    # exercising the K-accumulator init/accumulate/finalize path.
    run_case(batch=4, seq=64, in_features=256, out_features=384, key=keys[1],
             tm_max=128, tn_max=128, tk_max=128)
    # K not a multiple of 128 (zero-padded K tail) + ragged M (M=5, not 8-aligned).
    run_case(batch=1, seq=5, in_features=200, out_features=96, key=keys[2])
    # No-bias path (module supports bias=False).
    run_case(batch=2, seq=8, in_features=32, out_features=64, key=keys[3],
             use_bias=False)

    print("KERNEL_OK")
</pallas_src>

<mosaic_0001>
module attributes {stable_mosaic.version = 11 : i64} {
  func.func @_masked_linear_kernel(%arg0: i32, %arg1: i32, %arg2: i32, %arg3: memref<8x128xbf16, #tpu.memory_space<vmem>>, %arg4: memref<128x128xbf16, #tpu.memory_space<vmem>>, %arg5: memref<1x128xf32, #tpu.memory_space<vmem>>, %arg6: memref<8x128xf32, #tpu.memory_space<vmem>>, %arg7: memref<8x128xf32, #tpu.memory_space<vmem>>) attributes {dimension_semantics = [#tpu.dimension_semantics<parallel>, #tpu.dimension_semantics<parallel>, #tpu.dimension_semantics<arbitrary>], iteration_bounds = array<i64: 2, 1, 1>, scalar_prefetch = 0 : i64, scratch_operands = 1 : i64, tpu.core_type = #tpu.core_type<tc>, window_params = [{transform_indices = @transform_0, window_bounds = array<i64: 8, 128>}, {transform_indices = @transform_1, window_bounds = array<i64: 128, 128>}, {transform_indices = @transform_2, window_bounds = array<i64: 1, 128>}, {transform_indices = @transform_3, window_bounds = array<i64: 8, 128>}]} {
    %c0 = arith.constant 0 : index
    %c0_0 = arith.constant 0 : index
    %0 = vector.load %arg3[%c0, %c0_0] : memref<8x128xbf16, #tpu.memory_space<vmem>>, vector<8x128xbf16>
    %c0_1 = arith.constant 0 : index
    %c0_2 = arith.constant 0 : index
    %1 = vector.load %arg4[%c0_1, %c0_2] : memref<128x128xbf16, #tpu.memory_space<vmem>>, vector<128x128xbf16>
    %cst = arith.constant dense<0.000000e+00> : vector<8x128xf32>
    %2 = tpu.matmul %0, %1, %cst {dimension_numbers = #tpu.dot_dimension_numbers<[1], [0], [0], [1], [0, 0, 1, 1], [], []>} : vector<8x128xbf16>, vector<128x128xbf16>, vector<8x128xf32> -> vector<8x128xf32>
    %c0_i32 = arith.constant 0 : i32
    %3 = arith.cmpi eq, %arg2, %c0_i32 : i32
    %4 = arith.extui %3 : i1 to i32
    %c0_i32_3 = arith.constant 0 : i32
    %5 = arith.cmpi ne, %4, %c0_i32_3 : i32
    scf.if %5 {
      %c0_8 = arith.constant 0 : index
      %c0_9 = arith.constant 0 : index
      %12 = vector.load %arg7[%c0_8, %c0_9] : memref<8x128xf32, #tpu.memory_space<vmem>>, vector<8x128xf32>
      tpu.vector_store %arg7[%c0_8, %c0_9], %2 {strides = array<i32>} : memref<8x128xf32, #tpu.memory_space<vmem>>, vector<8x128xf32>,
    } else {
    }
    %c0_i32_4 = arith.constant 0 : i32
    %6 = arith.cmpi ne, %arg2, %c0_i32_4 : i32
    %7 = arith.extui %6 : i1 to i32
    %c0_i32_5 = arith.constant 0 : i32
    %8 = arith.cmpi ne, %7, %c0_i32_5 : i32
    scf.if %8 {
      %c0_8 = arith.constant 0 : index
      %c0_9 = arith.constant 0 : index
      %12 = vector.load %arg7[%c0_8, %c0_9] : memref<8x128xf32, #tpu.memory_space<vmem>>, vector<8x128xf32>
      %13 = arith.addf %12, %2 : vector<8x128xf32>
      %c0_10 = arith.constant 0 : index
      %c0_11 = arith.constant 0 : index
      %14 = vector.load %arg7[%c0_10, %c0_11] : memref<8x128xf32, #tpu.memory_space<vmem>>, vector<8x128xf32>
      tpu.vector_store %arg7[%c0_10, %c0_11], %13 {strides = array<i32>} : memref<8x128xf32, #tpu.memory_space<vmem>>, vector<8x128xf32>,
    } else {
    }
    %c0_i32_6 = arith.constant 0 : i32
    %9 = arith.cmpi eq, %arg2, %c0_i32_6 : i32
    %10 = arith.extui %9 : i1 to i32
    %c0_i32_7 = arith.constant 0 : i32
    %11 = arith.cmpi ne, %10, %c0_i32_7 : i32
    scf.if %11 {
      %c0_8 = arith.constant 0 : index
      %c0_9 = arith.constant 0 : index
      %12 = vector.load %arg7[%c0_8, %c0_9] : memref<8x128xf32, #tpu.memory_space<vmem>>, vector<8x128xf32>
      %c0_10 = arith.constant 0 : index
      %c0_11 = arith.constant 0 : index
      %13 = vector.load %arg5[%c0_10, %c0_11] : memref<1x128xf32, #tpu.memory_space<vmem>>, vector<1x128xf32>
      %14 = vector.broadcast %13 : vector<1x128xf32> to vector<8x128xf32>
      %15 = arith.addf %12, %14 : vector<8x128xf32>
      %c0_12 = arith.constant 0 : index
      %c0_13 = arith.constant 0 : index
      %16 = vector.load %arg6[%c0_12, %c0_13] : memref<8x128xf32, #tpu.memory_space<vmem>>, vector<8x128xf32>
      tpu.vector_store %arg6[%c0_12, %c0_13], %15 {strides = array<i32>} : memref<8x128xf32, #tpu.memory_space<vmem>>, vector<8x128xf32>,
    } else {
    }
    return
  }
  func.func @transform_0(%arg0: i32, %arg1: i32, %arg2: i32) -> (i32, i32) {
    %c0_i32 = arith.constant 0 : i32
    return %arg0, %arg2 : i32, i32
  }
  func.func @transform_1(%arg0: i32, %arg1: i32, %arg2: i32) -> (i32, i32) {
    %c0_i32 = arith.constant 0 : i32
    return %arg2, %arg1 : i32, i32
  }
  func.func @transform_2(%arg0: i32, %arg1: i32, %arg2: i32) -> (i32, i32) {
    %c0_i32 = arith.constant 0 : i32
    %c0_i32_0 = arith.constant 0 : i32
    return %c0_i32, %arg1 : i32, i32
  }
  func.func @transform_3(%arg0: i32, %arg1: i32, %arg2: i32) -> (i32, i32) {
    %c0_i32 = arith.constant 0 : i32
    return %arg0, %arg1 : i32, i32
  }
}

</mosaic_0001>

<llo_original>
// kernel: masked_linear.1
$region0: #{masked_linear.1}
  #allocation0 [shape = 'u32[]', space=smem, size = 0x4, offset = 0x4, fixed_abs, tag = 'smem constant byte address 0x4 - core index']
  #allocation1 [shape = 'u32[144,128]{1,0:T(1,128)}', space=vmem, size = 0x12000, scoped, tag = 'internal scratch']
  #allocation2 [shape = 'f32[8,128]{1,0:T(8,128)}', space=vmem, size = 0x1000, scoped, tag = 'scratch operand']
  %s0 = inlined_call_operand.vmem [shape: bf16[16,128], index: 0, kind: input, shape index: {}]
  %s1 = inlined_call_operand.vmem [shape: bf16[128,64], index: 1, kind: input, shape index: {}]
  %s2 = inlined_call_operand.vmem [shape: f32[1,64], index: 2, kind: input, shape index: {}]
  %s3 = inlined_call_operand.hbm [shape: f32[16,64], index: 3, kind: output, shape index: {}]
  %s4 = sld [smem:[#allocation0]]
  $region57: #{masked_linear.1} parent=0
    _
  %s6 = ssub.s32 1, %s4
  %s7 = scalar_select 0, %s6, %s4
  $region1: #{masked_linear.1} parent=0
    #allocation3 [shape = 'u8[8192]{0}', space=vmem, size = 0x2000, scoped, tag = 'output window, operand 0']
    #allocation4 [shape = 's32[2]{0}', space=sflag, size = 0x8, scoped, tag = 'scoped memory for masked_linear.1']
    %8 = vsyncpa [#allocation4], 0
    %s9 = scalar_lea.sflag [#allocation4], 1
    %10 = vsyncpa %s9, 0
    loop: start=0, step=1, limit=4
    $region2: #{masked_linear.1} parent=1 // loop_pre_header
      _
    $region3: #{masked_linear.1} parent=1 // loop_header
      %s12 = sphi 0, %s16
      %p13 = scmp.ge.s32.totalorder %s12, 4
      %s19 = sphi 0, %s38
      %s20 = sphi 0, %s34
      %s21 = sphi 0, %s30
      %s22 = sphi 0, %s19
      %s23 = sphi 0, %s20
      %s24 = sphi 0, %s21
      %s25 = sphi 0, %s22
      %s26 = sphi 0, %s23
      %s27 = sphi 0, %s24
      %s43 = sphi 0, %s45
      %s46 = sphi 0, %s43
      %s47 = sphi 0, %s46
      %s63 = sphi 0, %s47
      %s71 = sphi 0, %s73
      %s74 = sphi 0, %s71
      %s75 = sphi 0, %s74
      %s91 = sphi 0, %s75
      %s97 = sphi 0, %s99
      %s100 = sphi 0, %s97
      %s101 = sphi 0, %s100
      %s117 = sphi 0, %s101
      %s125 = sphi 0, %s127
      %s128 = sphi 0, %s125
      %s129 = sphi 0, %s128
      %s145 = sphi 0, %s129
    $region4: #{masked_linear.1} parent=1 // loop_header_branch
      %15 = sbr.rel (%p13) target = $region8
    $region5: #{masked_linear.1} parent=1 // loop_body
      %s17 = ssub.s32 %s12, 1
      %s18 = ssub.s32 %s12, 2
      %s28 = sadd.s32 1, %s21
      %p29 = scmp.ge.s32.totalorder %s28, 1
      %s30 = scalar_select %p29, 0, %s28
      %s31 = sadd.s32 1, %s20
      %s32 = scalar_select %p29, %s31, %s20
      %p33 = scmp.ge.s32.totalorder %s32, 1
      %s34 = scalar_select %p33, 0, %s32
      %s35 = sadd.s32 1, %s19
      %s36 = scalar_select %p33, %s35, %s19
      %p37 = scmp.ge.s32.totalorder %s36, 2
      %s38 = scalar_select %p37, 0, %s36
      %s39 = ssub.s32 %s19, %s38
      %s40 = ssub.s32 %s21, %s30
      %s41 = sor.u32 %s39, %s40
      %p42 = scmp.eq.s32.totalorder %s41, 0
      %s44 = sadd.s32 %s43, 1
      %s45 = scalar_select %p42, %s43, %s44
      %p48 = pneg %p42
      %p49 = scmp.eq.s32.totalorder %s12, 1
      %p50 = por %p48, %p49
      %p51 = scmp.ne.s32.totalorder %s43, %s46
      %p52 = scmp.eq.s32.totalorder %s12, 0
      %p53 = por %p51, %p52
      %p54 = scmp.ne.s32.totalorder %s43, %s46
      %p55 = scmp.eq.s32.totalorder %s17, 1
      %p56 = por %p54, %p55
      %p57 = scmp.ne.s32.totalorder %s46, %s47
      %p58 = scmp.eq.s32.totalorder %s17, 0
      %p59 = por %p57, %p58
      %p60 = scmp.ne.s32.totalorder %s46, %s47
      %p61 = scmp.eq.s32.totalorder %s18, 1
      %p62 = por %p60, %p61
      %p64 = scmp.ne.s32.totalorder %s47, %s63
      %p65 = scmp.eq.s32.totalorder %s18, 0
      %p66 = por %p64, %p65
      %s67 = ssub.s32 %s21, %s30
      %s68 = ssub.s32 %s20, %s34
      %s69 = sor.u32 %s67, %s68
      %p70 = scmp.eq.s32.totalorder %s69, 0
      %s72 = sadd.s32 %s71, 1
      %s73 = scalar_select %p70, %s71, %s72
      %p76 = pneg %p70
      %p77 = scmp.eq.s32.totalorder %s12, 1
      %p78 = por %p76, %p77
      %p79 = scmp.ne.s32.totalorder %s71, %s74
      %p80 = scmp.eq.s32.totalorder %s12, 0
      %p81 = por %p79, %p80
      %p82 = scmp.ne.s32.totalorder %s71, %s74
      %p83 = scmp.eq.s32.totalorder %s17, 1
      %p84 = por %p82, %p83
      %p85 = scmp.ne.s32.totalorder %s74, %s75
      %p86 = scmp.eq.s32.totalorder %s17, 0
      %p87 = por %p85, %p86
      %p88 = scmp.ne.s32.totalorder %s74, %s75
      %p89 = scmp.eq.s32.totalorder %s18, 1
      %p90 = por %p88, %p89
      %p92 = scmp.ne.s32.totalorder %s75, %s91
      %p93 = scmp.eq.s32.totalorder %s18, 0
      %p94 = por %p92, %p93
      %s95 = ssub.s32 %s20, %s34
      %p96 = scmp.eq.s32.totalorder %s95, 0
      %s98 = sadd.s32 %s97, 1
      %s99 = scalar_select %p96, %s97, %s98
      %p102 = pneg %p96
      %p103 = scmp.eq.s32.totalorder %s12, 1
      %p104 = por %p102, %p103
      %p105 = scmp.ne.s32.totalorder %s97, %s100
      %p106 = scmp.eq.s32.totalorder %s12, 0
      %p107 = por %p105, %p106
      %p108 = scmp.ne.s32.totalorder %s97, %s100
      %p109 = scmp.eq.s32.totalorder %s17, 1
      %p110 = por %p108, %p109
      %p111 = scmp.ne.s32.totalorder %s100, %s101
      %p112 = scmp.eq.s32.totalorder %s17, 0
      %p113 = por %p111, %p112
      %p114 = scmp.ne.s32.totalorder %s100, %s101
      %p115 = scmp.eq.s32.totalorder %s18, 1
      %p116 = por %p114, %p115
      %p118 = scmp.ne.s32.totalorder %s101, %s117
      %p119 = scmp.eq.s32.totalorder %s18, 0
      %p120 = por %p118, %p119
      %s121 = ssub.s32 %s19, %s38
      %s122 = ssub.s32 %s20, %s34
      %s123 = sor.u32 %s121, %s122
      %p124 = scmp.eq.s32.totalorder %s123, 0
      %s126 = sadd.s32 %s125, 1
      %s127 = scalar_select %p124, %s125, %s126
      %p130 = pneg %p124
      %p131 = scmp.eq.s32.totalorder %s12, 1
      %p132 = por %p130, %p131
      %p133 = scmp.ne.s32.totalorder %s125, %s128
      %p134 = scmp.eq.s32.totalorder %s12, 0
      %p135 = por %p133, %p134
      %p136 = scmp.ne.s32.totalorder %s125, %s128
      %p137 = scmp.eq.s32.totalorder %s17, 1
      %p138 = por %p136, %p137
      %p139 = scmp.ne.s32.totalorder %s128, %s129
      %p140 = scmp.eq.s32.totalorder %s17, 0
      %p141 = por %p139, %p140
      %p142 = scmp.ne.s32.totalorder %s128, %s129
      %p143 = scmp.eq.s32.totalorder %s18, 1
      %p144 = por %p142, %p143
      %p146 = scmp.ne.s32.totalorder %s129, %s145
      %p147 = scmp.eq.s32.totalorder %s18, 0
      %p148 = por %p146, %p147
      %p149 = scmp.le.s32.totalorder 1, %s12
      %p150 = scmp.lt.s32.totalorder %s12, 3
      %p151 = pnand %p149, %p150
      %p152 = pneg %p151
      // Predicated region
      $region9: #{masked_linear.1} parent=5 // pred_check
        _
      $region10: #{masked_linear.1} parent=5 // pred_check_branch
        %154 = sbr.rel (%p151) target = $region12
      $region11: #{masked_linear.1} parent=5 // pred_region
        %s155 = ssub.s32 %s12, 1
        // Predicated region
        $region13: #{masked_linear.1} parent=11 // pred_check
          %p156 = pneg %p87
        $region14: #{masked_linear.1} parent=11 // pred_check_branch
          %158 = sbr.rel (%p156) target = $region16
        $region15: #{masked_linear.1} parent=11 // pred_region
          %s159 = smul.u32 16, %s24
          %p160 = scmp.lt.s32.totalorder %s159, 15
          %s161 = scalar_select %p160, %s159, 15
          %p162 = scmp.lt.s32.totalorder %s23, 0
          %s163 = scalar_select %p162, %s23, 0
          %s164 = sadd.s32 %s163, %s161
          %s165 = smul.addr %s164, 4
          %s166 = scalar_lea.vmem %s1, %s165
          %s167 = smul.u32 16, %s24
        $region16: #{masked_linear.1} parent=11 // pred_fallthru
          _
        // Predicated region
        $region17: #{masked_linear.1} parent=11 // pred_check
          %p168 = pneg %p113
        $region18: #{masked_linear.1} parent=11 // pred_check_branch
          %170 = sbr.rel (%p168) target = $region20
        $region19: #{masked_linear.1} parent=11 // pred_region
          %p171 = scmp.lt.s32.totalorder %s23, 0
          %s172 = scalar_select %p171, %s23, 0
          %s173 = scalar_lea.vmem %s2, %s172
        $region20: #{masked_linear.1} parent=11 // pred_fallthru
          _
      $region12: #{masked_linear.1} parent=5 // pred_fallthru
        _
      %p174 = scmp.lt.s32.totalorder %s12, 2
      // Predicated region
      $region21: #{masked_linear.1} parent=5 // pred_check
        %p175 = pneg %p174
      $region22: #{masked_linear.1} parent=5 // pred_check_branch
        %177 = sbr.rel (%p175) target = $region24
      $region23: #{masked_linear.1} parent=5 // pred_region
        // Predicated region
        $region25: #{masked_linear.1} parent=23 // pred_check
          %p178 = pneg %p53
        $region26: #{masked_linear.1} parent=23 // pred_check_branch
          %180 = sbr.rel (%p178) target = $region28
        $region27: #{masked_linear.1} parent=23 // pred_region
          %p181 = scmp.lt.s32.totalorder %s19, 1
          %s182 = scalar_select %p181, %s19, 1
          %p183 = scmp.lt.s32.totalorder %s21, 0
          %s184 = scalar_select %p183, %s21, 0
          %s185 = sadd.s32 %s184, %s182
          %s186 = smul.addr %s185, 4
          %s187 = scalar_lea.vmem %s0, %s186
        $region28: #{masked_linear.1} parent=23 // pred_fallthru
          _
      $region24: #{masked_linear.1} parent=5 // pred_fallthru
        _
      %p188 = scmp.le.s32.totalorder 1, %s12
      %p189 = scmp.lt.s32.totalorder %s12, 3
      %p190 = pnand %p188, %p189
      %p191 = pneg %p190
      // Predicated region
      $region29: #{masked_linear.1} parent=5 // pred_check
        _
      $region30: #{masked_linear.1} parent=5 // pred_check_branch
        %193 = sbr.rel (%p190) target = $region32
      $region31: #{masked_linear.1} parent=5 // pred_region
        %s194 = ssub.s32 %s12, 1
        %p195 = scmp.lt.s32.totalorder %s22, 1
        %s196 = scalar_select %p195, %s22, 1
        %p197 = scmp.lt.s32.totalorder %s24, 0
        %s198 = scalar_select %p197, %s24, 0
        %s199 = sadd.s32 %s198, %s196
        %s200 = smul.addr %s199, 4
        %s201 = scalar_lea.vmem %s0, %s200
        %p202 = pneg %p59
        %p203 = pneg %p56
        %s204 = smul.u32 16, %s24
        %p205 = scmp.lt.s32.totalorder %s204, 15
        %s206 = scalar_select %p205, %s204, 15
        %p207 = scmp.lt.s32.totalorder %s23, 0
        %s208 = scalar_select %p207, %s23, 0
        %s209 = sadd.s32 %s208, %s206
        %s210 = smul.addr %s209, 4
        %s211 = scalar_lea.vmem %s1, %s210
        %p212 = pneg %p87
        %p213 = pneg %p84
        %p214 = scmp.lt.s32.totalorder %s23, 0
        %s215 = scalar_select %p214, %s23, 0
        %s216 = scalar_lea.vmem %s2, %s215
        %p217 = pneg %p113
        %p218 = pneg %p110
        %p219 = pneg %p141
        %p220 = pneg %p138
        %s221 = sand.u32 %s128, 1
        %s222 = scalar_lea.sflag [#allocation4], %s221
        %s223 = sand.u32 %s128, 1
        %s224 = smul.addr %s223, 8
        %s225 = scalar_lea.vmem [#allocation3], %s224
        %p226 = scmp.lt.s32.totalorder %s22, 1
        %s227 = scalar_select %p226, %s22, 1
        %p228 = scmp.lt.s32.totalorder %s24, 0
        %s229 = scalar_select %p228, %s24, 0
        %s230 = sadd.s32 %s229, %s227
        %s231 = smul.addr %s230, 4
        %s232 = scalar_lea.vmem %s0, %s231
        %s233 = smul.u32 16, %s24
        %p234 = scmp.lt.s32.totalorder %s233, 15
        %s235 = scalar_select %p234, %s233, 15
        %p236 = scmp.lt.s32.totalorder %s23, 0
        %s237 = scalar_select %p236, %s23, 0
        %s238 = sadd.s32 %s237, %s235
        %s239 = smul.addr %s238, 4
        %s240 = scalar_lea.vmem %s1, %s239
        %s241 = smul.u32 16, %s24
        %p242 = scmp.lt.s32.totalorder %s23, 0
        %s243 = scalar_select %p242, %s23, 0
        %s244 = scalar_lea.vmem %s2, %s243
        %v246 = vld [vmem:[%s232] sm:$0xf]
        %v247 = vld [vmem:[%s240] sm:$0xf]
        %v248 = vld [vmem:[%s240 + $0x4] sm:$0xf]
        %v249 = vld [vmem:[%s240 + $0x8] sm:$0xf]
        %v250 = vld [vmem:[%s240 + $0xc] sm:$0xf]
        %v251 = vld [vmem:[%s240 + $0x10] sm:$0xf]
        %v252 = vld [vmem:[%s240 + $0x14] sm:$0xf]
        %v253 = vld [vmem:[%s240 + $0x18] sm:$0xf]
        %v254 = vld [vmem:[%s240 + $0x1c] sm:$0xf]
        %v255 = vld [vmem:[%s240 + $0x20] sm:$0xf]
        %v256 = vld [vmem:[%s240 + $0x24] sm:$0xf]
        %v257 = vld [vmem:[%s240 + $0x28] sm:$0xf]
        %v258 = vld [vmem:[%s240 + $0x2c] sm:$0xf]
        %v259 = vld [vmem:[%s240 + $0x30] sm:$0xf]
        %v260 = vld [vmem:[%s240 + $0x34] sm:$0xf]
        %v261 = vld [vmem:[%s240 + $0x38] sm:$0xf]
        %v262 = vld [vmem:[%s240 + $0x3c] sm:$0xf]
        %v279 = vunpack.c.l.b16 %v247
        %v280 = vunpack.c.l.b16 %v248
        %v281 = vunpack.c.l.b16 %v249
        %v282 = vunpack.c.l.b16 %v250
        %v283 = vunpack.c.l.b16 %v251
        %v284 = vunpack.c.l.b16 %v252
        %v285 = vunpack.c.l.b16 %v253
        %v286 = vunpack.c.l.b16 %v254
        %v287 = vunpack.c.l.b16 %v255
        %v288 = vunpack.c.l.b16 %v256
        %v289 = vunpack.c.l.b16 %v257
        %v290 = vunpack.c.l.b16 %v258
        %v291 = vunpack.c.l.b16 %v259
        %v292 = vunpack.c.l.b16 %v260
        %v293 = vunpack.c.l.b16 %v261
        %v294 = vunpack.c.l.b16 %v262
        %v295 = vpack.c.b16 %v280, %v279
        %v296 = vpack.c.b16 %v282, %v281
        %v297 = vpack.c.b16 %v284, %v283
        %v298 = vpack.c.b16 %v286, %v285
        %v299 = vpack.c.b16 %v288, %v287
        %v300 = vpack.c.b16 %v290, %v289
        %v301 = vpack.c.b16 %v292, %v291
        %v302 = vpack.c.b16 %v294, %v293
        %311 = vmatprep.subr.bf16.mxu0 0
        %312 = vmatpush1.bf16.msra.mxu0 %v295
        %313 = vmatprep.subr.bf16.mxu0 0
        %314 = vmatpush1.bf16.msra.mxu0 %v296
        %315 = vmatprep.subr.bf16.mxu0 0
        %316 = vmatpush1.bf16.msra.mxu0 %v297
        %317 = vmatprep.subr.bf16.mxu0 0
        %318 = vmatpush1.bf16.msra.mxu0 %v298
        %319 = vmatprep.subr.bf16.mxu0 0
        %320 = vmatpush1.bf16.msra.mxu0 %v299
        %321 = vmatprep.subr.bf16.mxu0 0
        %322 = vmatpush1.bf16.msra.mxu0 %v300
        %323 = vmatprep.subr.bf16.mxu0 0
        %324 = vmatpush1.bf16.msra.mxu0 %v301
        %325 = vmatprep.subr.bf16.mxu0 0
        %326 = vmatpush1.bf16.msra.mxu0 %v302
        %327 = vmatprep.subr.bf16.mxu0 0
        %328 = vmatpush1.bf16.msra.mxu0 0
        %329 = vmatprep.subr.bf16.mxu0 0
        %330 = vmatpush1.bf16.msra.mxu0 0
        %331 = vmatprep.subr.bf16.mxu0 0
        %332 = vmatpush1.bf16.msra.mxu0 0
        %333 = vmatprep.subr.bf16.mxu0 0
        %334 = vmatpush1.bf16.msra.mxu0 0
        %335 = vmatprep.subr.bf16.mxu0 0
        %336 = vmatpush1.bf16.msra.mxu0 0
        %337 = vmatprep.subr.bf16.mxu0 0
        %338 = vmatpush1.bf16.msra.mxu0 0
        %339 = vmatprep.subr.bf16.mxu0 0
        %340 = vmatpush1.bf16.msra.mxu0 0
        %341 = vmatprep.subr.bf16.mxu0 0
        %342 = vmatpush1.bf16.msra.mxu0 0
        %343 = vmatprep.mubr.bf16.mxu0 0
        %344 = vmatmul.mubr.bf16.gmra.mrb[0].mxu0 %v246
        %v345 = vpop.f32.mrb[0].mxu0
        %v346 = vadd.f32 0.0, %v345
        %v347 = vpop.f32.mrb[0].mxu0
        %v348 = vpop.f32.mrb[0].mxu0
        %v349 = vpop.f32.mrb[0].mxu0
        %350 = vdwg.mxu0
        %p351 = scmp.eq.s32.totalorder %s24, 0
        // Predicated region
        $region33: #{masked_linear.1} parent=31 // pred_check
          %p352 = pneg %p351
        $region34: #{masked_linear.1} parent=31 // pred_check_branch
          %354 = sbr.rel (%p352) target = $region36
        $region35: #{masked_linear.1} parent=31 // pred_region
          %355 = vst [vmem:[#allocation2] sm:$0xff] %v346
        $region36: #{masked_linear.1} parent=31 // pred_fallthru
          _
        %p356 = scmp.ne.s32.totalorder %s24, 0
        // Predicated region
        $region37: #{masked_linear.1} parent=31 // pred_check
          %p357 = pneg %p356
        $region38: #{masked_linear.1} parent=31 // pred_check_branch
          %359 = sbr.rel (%p357) target = $region40
        $region39: #{masked_linear.1} parent=31 // pred_region
          %v360 = vld [vmem:[#allocation2] sm:$0xff]
          %v361 = vadd.f32 %v360, %v346
          %362 = vst [vmem:[#allocation2] sm:$0xff] %v361
        $region40: #{masked_linear.1} parent=31 // pred_fallthru
          _
        // Predicated region
        $region41: #{masked_linear.1} parent=31 // pred_check
          %p363 = pneg %p351
        $region42: #{masked_linear.1} parent=31 // pred_check_branch
          %365 = sbr.rel (%p363) target = $region44
        $region43: #{masked_linear.1} parent=31 // pred_region
          %v366 = vld [vmem:[#allocation2] sm:$0xff]
          %v367 = vld [vmem:[%s244] sm:$0x1]
          %v369 = vlaneseq
          %v370 = vshrl.u32 %v369, 7
          %v371 = vsub.s32 0, %v370
          %v372 = vrot.slane %v367, %v371
          %v374 = vadd.f32 %v366, %v372
          %375 = vst [vmem:[%s225] sm:$0xff] %v374
        $region44: #{masked_linear.1} parent=31 // pred_fallthru
          _
        %s376 = sand.u32 %s128, 1
        %s377 = scalar_lea.sflag [#allocation4], %s376
        %s378 = sand.u32 %s128, 1
        %s379 = smul.addr %s378, 8
        %s380 = scalar_lea.vmem [#allocation3], %s379
        // Predicated region
        $region45: #{masked_linear.1} parent=31 // pred_check
          %p381 = pneg %p138
        $region46: #{masked_linear.1} parent=31 // pred_check_branch
          %383 = sbr.rel (%p381) target = $region48
        $region47: #{masked_linear.1} parent=31 // pred_region
          %s385 = ssub.s32 128, 128
          %386 = vsyncadd %s377, %s385
          %s387 = sadd.s32 %s23, %s22
          %s388 = smul.addr %s387, 128
          %s389 = scalar_lea.hbm %s3, %s388
          %s391 = sshll.u32 %s380, 4
          %s392 = int_to_ptr.vmem [resolvable:$true] %s391
          %394 = dma.vmem_to_hbm [thread:$0]  %s392, 128, %s389, %s377
        $region48: #{masked_linear.1} parent=31 // pred_fallthru
          _
      $region32: #{masked_linear.1} parent=5 // pred_fallthru
        _
      %p395 = scmp.le.s32.totalorder 2, %s12
      // Predicated region
      $region49: #{masked_linear.1} parent=5 // pred_check
        %p396 = pneg %p395
      $region50: #{masked_linear.1} parent=5 // pred_check_branch
        %398 = sbr.rel (%p396) target = $region52
      $region51: #{masked_linear.1} parent=5 // pred_region
        %s399 = ssub.s32 %s12, 2
        // Predicated region
        $region53: #{masked_linear.1} parent=51 // pred_check
          %p400 = pneg %p144
        $region54: #{masked_linear.1} parent=51 // pred_check_branch
          %402 = sbr.rel (%p400) target = $region56
        $region55: #{masked_linear.1} parent=51 // pred_region
          %s403 = sand.u32 %s129, 1
          %s404 = scalar_lea.sflag [#allocation4], %s403
          %s405 = sand.u32 %s129, 1
          %s406 = smul.addr %s405, 8
          %s407 = scalar_lea.vmem [#allocation3], %s406
          %408 = dma.done %s404, 128
        $region56: #{masked_linear.1} parent=51 // pred_fallthru
          _
      $region52: #{masked_linear.1} parent=5 // pred_fallthru
        _
    $region6: #{masked_linear.1} parent=1 // loop_footer
      %s16 = sadd.s32 1, %s12
    $region7: #{masked_linear.1} parent=1 // loop_footer_branch
      %11 = sbr.rel target = $region3
    $region8: #{masked_linear.1} parent=1 // loop_exit
      _
    %409 = vsyncpa [#allocation4], 1
    %s410 = scalar_lea.sflag [#allocation4], 1
    %411 = vsyncpa %s410, 1

</llo_original>
